<compile_context>
chip_gen: v7x
topology: tpu7x:2x2x1
jax: 0.10.0
libtpu: 0.0.40
codegen_flags: <defaults>
</compile_context>

<pallas_src>
import functools
import numpy as np

import jax
import jax.numpy as jnp
from jax.experimental import pallas as pl
from jax.experimental.pallas import tpu as pltpu


# ----------------------------------------------------------------------------
# Kernel: fused 2x2 merge + LayerNorm(4C) + Linear(4C -> 2C, bias=False)
# on a (TR, 2, W2, 2C) tile of the (free-)reshaped input.
# ----------------------------------------------------------------------------
def _patch_merging_kernel(x_ref, we_ref, wo_ref, b_ref, o_ref, *, eps, inv_n):
    # x_ref : (TR, 2, W2, 2C)  TR merged rows; dim1 = H parity (even/odd row)
    #         even row channels per token = [x0 | x2], odd row = [x1 | x3]
    # we_ref: (2C, 2Cout) bf16  gamma-folded weight rows for [x0 | x2]
    # wo_ref: (2C, 2Cout) bf16  gamma-folded weight rows for [x1 | x3]
    # b_ref : (1, 2Cout)  f32   beta @ W
    # o_ref : (TR, W2, 2Cout)
    tr, _, w2, c2 = x_ref.shape
    tm = tr * w2

    x = x_ref[...].astype(jnp.float32)                 # (TR, 2, W2, 2C)
    xe = x[:, 0, :, :].reshape(tm, c2)                 # (TM, 2C)  [x0 | x2]
    xo = x[:, 1, :, :].reshape(tm, c2)                 # (TM, 2C)  [x1 | x3]

    # Single-pass LayerNorm stats over the full 4C: E[x], E[x^2].
    s = (jnp.sum(xe, axis=-1, keepdims=True)
         + jnp.sum(xo, axis=-1, keepdims=True))        # (TM, 1)
    sq = (jnp.sum(xe * xe, axis=-1, keepdims=True)
          + jnp.sum(xo * xo, axis=-1, keepdims=True))  # (TM, 1)
    mean = s * inv_n
    var = sq * inv_n - mean * mean
    inv = jax.lax.rsqrt(var + eps)                     # EUP rsqrt

    ye = ((xe - mean) * inv).astype(jnp.bfloat16)      # gamma folded into W
    yo = ((xo - mean) * inv).astype(jnp.bfloat16)

    # Two accumulated GEMMs on the MXU (bf16 operands, f32 accumulation),
    # plus the precomputed beta-bias.
    out = jnp.dot(ye, we_ref[...], preferred_element_type=jnp.float32)
    out = out + jnp.dot(yo, wo_ref[...], preferred_element_type=jnp.float32)
    out = out + b_ref[...]                             # (TM, 2Cout)

    o_ref[...] = out.reshape(tr, w2, -1).astype(o_ref.dtype)


# ----------------------------------------------------------------------------
# Wrapper
# ----------------------------------------------------------------------------
def patch_merging(x, gamma, beta, w_reduction, *, eps=1e-5):
    """
    x           : (B, D, H, W, C) float32
    gamma, beta : (4C,)                  -- LayerNorm affine params
    w_reduction : (4C, 2C)               -- PyTorch reduction.weight.T
    returns     : (B, D, ceil(H/2), ceil(W/2), 2C) float32
    """
    B, D, H, W, C = x.shape
    C4, C2, Cout = 4 * C, 2 * C, 2 * C
    assert w_reduction.shape == (C4, Cout)

    # Pad H, W to even only when needed (single extra HBM pass, odd dims only).
    if (H % 2) or (W % 2):
        x = jnp.pad(x, ((0, 0), (0, 0), (0, H % 2), (0, W % 2), (0, 0)))
    Hp, Wp = x.shape[2], x.shape[3]
    H2, W2 = Hp // 2, Wp // 2
    R = B * D * H2

    # Free, contiguous dim-regrouping (no HBM copy):
    # (B, D, Hp, Wp, C) -> (R, 2, W2, 2C) where dim1 is the H parity and the
    # last dim packs the two W-neighbours' channels contiguously.
    x_r = x.reshape(R, 2, W2, C2)

    # ---- host-side operand prep (tiny, done once) ----------------------------
    g = gamma.astype(jnp.float32)
    w = w_reduction.astype(jnp.float32)
    w0, w1, w2_, w3 = w[0:C], w[C:2 * C], w[2 * C:3 * C], w[3 * C:4 * C]
    g0, g1, g2_, g3 = g[0:C], g[C:2 * C], g[2 * C:3 * C], g[3 * C:4 * C]
    # even-H slab channels = [x0 | x2]; odd-H slab channels = [x1 | x3]
    w_even = (jnp.concatenate([g0, g2_])[:, None]
              * jnp.concatenate([w0, w2_], axis=0)).astype(jnp.bfloat16)
    w_odd = (jnp.concatenate([g1, g3])[:, None]
             * jnp.concatenate([w1, w3], axis=0)).astype(jnp.bfloat16)
    bias = (beta.astype(jnp.float32) @ w).reshape(1, Cout)  # f32 precompute

    # ---- tile sizing ----------------------------------------------------------
    # ~1 MiB of streamed f32 input per grid step (TM tokens * 4C * 4 bytes),
    # capped so megacore parts still get >= 2 grid steps per TensorCore.
    target_tokens = max(8, (1 << 20) // (16 * C))
    tr = max(1, min(R, target_tokens // max(W2, 1)))
    if R >= 4:
        tr = min(tr, R // 4)
    grid_m = pl.cdiv(R, tr)          # ragged last block is fine (rows independent)

    kernel = functools.partial(_patch_merging_kernel, eps=eps, inv_n=1.0 / C4)

    out = pl.pallas_call(
        kernel,
        out_shape=jax.ShapeDtypeStruct((R, W2, Cout), jnp.float32),
        grid_spec=pltpu.PrefetchScalarGridSpec(
            num_scalar_prefetch=0,
            grid=(grid_m,),
            in_specs=[
                pl.BlockSpec((tr, 2, W2, C2), lambda i: (i, 0, 0, 0)),  # streamed
                pl.BlockSpec((C2, Cout), lambda i: (0, 0)),             # resident
                pl.BlockSpec((C2, Cout), lambda i: (0, 0)),             # resident
                pl.BlockSpec((1, Cout), lambda i: (0, 0)),              # resident
            ],
            out_specs=pl.BlockSpec((tr, W2, Cout), lambda i: (i, 0, 0)),
        ),
        compiler_params=pltpu.CompilerParams(
            dimension_semantics=("parallel",)),
    )(x_r, w_even, w_odd, bias)

    return out.reshape(B, D, H2, W2, Cout)


# ----------------------------------------------------------------------------
# Pure-JAX reference (same math as the PyTorch forward)
# ----------------------------------------------------------------------------
def ref_forward(x, gamma, beta, w_reduction, eps=1e-5):
    B, D, H, W, C = x.shape
    x = jnp.pad(x, ((0, 0), (0, 0), (0, H % 2), (0, W % 2), (0, 0)))
    x0 = x[:, :, 0::2, 0::2, :]
    x1 = x[:, :, 1::2, 0::2, :]
    x2 = x[:, :, 0::2, 1::2, :]
    x3 = x[:, :, 1::2, 1::2, :]
    xm = jnp.concatenate([x0, x1, x2, x3], axis=-1)
    mean = jnp.mean(xm, axis=-1, keepdims=True)
    var = jnp.mean((xm - mean) ** 2, axis=-1, keepdims=True)
    y = (xm - mean) / jnp.sqrt(var + eps) * gamma + beta
    return jnp.einsum("...k,kn->...n", y, w_reduction)


# ----------------------------------------------------------------------------
if __name__ == "__main__":
    key = jax.random.PRNGKey(0)
    merged_fn = jax.jit(patch_merging)

    def run_case(B, D, H, W, C, key):
        k_x, k_g, k_b, k_w = jax.random.split(key, 4)
        x = jax.random.normal(k_x, (B, D, H, W, C), dtype=jnp.float32)
        gamma = 1.0 + 0.02 * jax.random.normal(k_g, (4 * C,), dtype=jnp.float32)
        beta = 0.02 * jax.random.normal(k_b, (4 * C,), dtype=jnp.float32)
        # PyTorch: reduction.weight has shape (2C, 4C); we pass its transpose.
        w_red = 0.05 * jax.random.normal(k_w, (4 * C, 2 * C), dtype=jnp.float32)

        out = jax.block_until_ready(merged_fn(x, gamma, beta, w_red))
        expected = ref_forward(x, gamma, beta, w_red)
        # bf16 MXU operands (and gamma folded into bf16 weights) with f32
        # accumulation -> intentionally loosened tolerance vs. f32 reference.
        np.testing.assert_allclose(np.asarray(out), np.asarray(expected),
                                   rtol=2e-2, atol=2e-2)

    k1, k2 = jax.random.split(key)
    # Case 1: odd H exercises the padding branch; grid divides evenly.
    run_case(B=2, D=2, H=7, W=6, C=64, key=k1)
    # Case 2: ragged grid (R not divisible by the row tile) -> masked edge block.
    run_case(B=1, D=3, H=6, W=10, C=64, key=k2)

    print("KERNEL_OK")
</pallas_src>

<mosaic_0001>
module attributes {stable_mosaic.version = 11 : i64} {
  func.func @_patch_merging_kernel(%arg0: i32, %arg1: memref<4x2x3x128xf32, #tpu.memory_space<vmem>>, %arg2: memref<128x128xbf16, #tpu.memory_space<vmem>>, %arg3: memref<128x128xbf16, #tpu.memory_space<vmem>>, %arg4: memref<1x128xf32, #tpu.memory_space<vmem>>, %arg5: memref<4x3x128xf32, #tpu.memory_space<vmem>>) attributes {dimension_semantics = [#tpu.dimension_semantics<parallel>], iteration_bounds = array<i64: 4>, scalar_prefetch = 0 : i64, scratch_operands = 0 : i64, tpu.core_type = #tpu.core_type<tc>, window_params = [{transform_indices = @transform_0, window_bounds = array<i64: 4, 2, 3, 128>}, {pipeline_mode = #tpu.pipeline_mode<synchronous>, transform_indices = @transform_1, window_bounds = array<i64: 128, 128>}, {pipeline_mode = #tpu.pipeline_mode<synchronous>, transform_indices = @transform_2, window_bounds = array<i64: 128, 128>}, {pipeline_mode = #tpu.pipeline_mode<synchronous>, transform_indices = @transform_3, window_bounds = array<i64: 1, 128>}, {transform_indices = @transform_4, window_bounds = array<i64: 4, 3, 128>}]} {
    %c0 = arith.constant 0 : index
    %c0_0 = arith.constant 0 : index
    %c0_1 = arith.constant 0 : index
    %c0_2 = arith.constant 0 : index
    %0 = vector.load %arg1[%c0, %c0_0, %c0_1, %c0_2] : memref<4x2x3x128xf32, #tpu.memory_space<vmem>>, vector<4x2x3x128xf32>
    %1 = vector.extract_strided_slice %0 {offsets = [0, 0, 0, 0], sizes = [4, 1, 3, 128], strides = [1, 1, 1, 1]} : vector<4x2x3x128xf32> to vector<4x1x3x128xf32>
    %2 = vector.shape_cast %1 : vector<4x1x3x128xf32> to vector<4x3x128xf32>
    %3 = vector.shape_cast %2 : vector<4x3x128xf32> to vector<12x128xf32>
    %4 = vector.extract_strided_slice %0 {offsets = [0, 1, 0, 0], sizes = [4, 1, 3, 128], strides = [1, 1, 1, 1]} : vector<4x2x3x128xf32> to vector<4x1x3x128xf32>
    %5 = vector.shape_cast %4 : vector<4x1x3x128xf32> to vector<4x3x128xf32>
    %6 = vector.shape_cast %5 : vector<4x3x128xf32> to vector<12x128xf32>
    %cst = arith.constant dense<0.000000e+00> : vector<12xf32>
    %7 = vector.multi_reduction <add>, %3, %cst [1] : vector<12x128xf32> to vector<12xf32>
    %8 = vector.shape_cast %7 : vector<12xf32> to vector<12x1xf32>
    %cst_3 = arith.constant dense<0.000000e+00> : vector<12xf32>
    %9 = vector.multi_reduction <add>, %6, %cst_3 [1] : vector<12x128xf32> to vector<12xf32>
    %10 = vector.shape_cast %9 : vector<12xf32> to vector<12x1xf32>
    %11 = arith.addf %8, %10 : vector<12x1xf32>
    %12 = arith.mulf %3, %3 : vector<12x128xf32>
    %cst_4 = arith.constant dense<0.000000e+00> : vector<12xf32>
    %13 = vector.multi_reduction <add>, %12, %cst_4 [1] : vector<12x128xf32> to vector<12xf32>
    %14 = vector.shape_cast %13 : vector<12xf32> to vector<12x1xf32>
    %15 = arith.mulf %6, %6 : vector<12x128xf32>
    %cst_5 = arith.constant dense<0.000000e+00> : vector<12xf32>
    %16 = vector.multi_reduction <add>, %15, %cst_5 [1] : vector<12x128xf32> to vector<12xf32>
    %17 = vector.shape_cast %16 : vector<12xf32> to vector<12x1xf32>
    %18 = arith.addf %14, %17 : vector<12x1xf32>
    %cst_6 = arith.constant 3.906250e-03 : f32
    %19 = vector.broadcast %cst_6 : f32 to vector<12x1xf32>
    %20 = arith.mulf %11, %19 : vector<12x1xf32>
    %cst_7 = arith.constant 3.906250e-03 : f32
    %21 = vector.broadcast %cst_7 : f32 to vector<12x1xf32>
    %22 = arith.mulf %18, %21 : vector<12x1xf32>
    %23 = arith.mulf %20, %20 : vector<12x1xf32>
    %24 = arith.subf %22, %23 : vector<12x1xf32>
    %cst_8 = arith.constant 9.99999974E-6 : f32
    %25 = vector.broadcast %cst_8 : f32 to vector<12x1xf32>
    %26 = arith.addf %24, %25 : vector<12x1xf32>
    %27 = math.rsqrt %26 : vector<12x1xf32>
    %28 = vector.broadcast %20 : vector<12x1xf32> to vector<12x128xf32>
    %29 = arith.subf %3, %28 : vector<12x128xf32>
    %30 = vector.broadcast %27 : vector<12x1xf32> to vector<12x128xf32>
    %31 = arith.mulf %29, %30 : vector<12x128xf32>
    %32 = arith.truncf %31 : vector<12x128xf32> to vector<12x128xbf16>
    %33 = vector.broadcast %20 : vector<12x1xf32> to vector<12x128xf32>
    %34 = arith.subf %6, %33 : vector<12x128xf32>
    %35 = vector.broadcast %27 : vector<12x1xf32> to vector<12x128xf32>
    %36 = arith.mulf %34, %35 : vector<12x128xf32>
    %37 = arith.truncf %36 : vector<12x128xf32> to vector<12x128xbf16>
    %c0_9 = arith.constant 0 : index
    %c0_10 = arith.constant 0 : index
    %38 = vector.load %arg2[%c0_9, %c0_10] : memref<128x128xbf16, #tpu.memory_space<vmem>>, vector<128x128xbf16>
    %cst_11 = arith.constant dense<0.000000e+00> : vector<12x128xf32>
    %39 = tpu.matmul %32, %38, %cst_11 {dimension_numbers = #tpu.dot_dimension_numbers<[1], [0], [0], [1], [0, 0, 1, 1], [], []>} : vector<12x128xbf16>, vector<128x128xbf16>, vector<12x128xf32> -> vector<12x128xf32>
    %c0_12 = arith.constant 0 : index
    %c0_13 = arith.constant 0 : index
    %40 = vector.load %arg3[%c0_12, %c0_13] : memref<128x128xbf16, #tpu.memory_space<vmem>>, vector<128x128xbf16>
    %cst_14 = arith.constant dense<0.000000e+00> : vector<12x128xf32>
    %41 = tpu.matmul %37, %40, %cst_14 {dimension_numbers = #tpu.dot_dimension_numbers<[1], [0], [0], [1], [0, 0, 1, 1], [], []>} : vector<12x128xbf16>, vector<128x128xbf16>, vector<12x128xf32> -> vector<12x128xf32>
    %42 = arith.addf %39, %41 : vector<12x128xf32>
    %c0_15 = arith.constant 0 : index
    %c0_16 = arith.constant 0 : index
    %43 = vector.load %arg4[%c0_15, %c0_16] : memref<1x128xf32, #tpu.memory_space<vmem>>, vector<1x128xf32>
    %44 = vector.broadcast %43 : vector<1x128xf32> to vector<12x128xf32>
    %45 = arith.addf %42, %44 : vector<12x128xf32>
    %46 = vector.shape_cast %45 : vector<12x128xf32> to vector<4x3x128xf32>
    %c0_17 = arith.constant 0 : index
    %c0_18 = arith.constant 0 : index
    %c0_19 = arith.constant 0 : index
    %47 = vector.load %arg5[%c0_17, %c0_18, %c0_19] : memref<4x3x128xf32, #tpu.memory_space<vmem>>, vector<4x3x128xf32>
    tpu.vector_store %arg5[%c0_17, %c0_18, %c0_19], %46 {strides = array<i32>} : memref<4x3x128xf32, #tpu.memory_space<vmem>>, vector<4x3x128xf32>,
    return
  }
  func.func @transform_0(%arg0: i32) -> (i32, i32, i32, i32) {
    %c0_i32 = arith.constant 0 : i32
    %c0_i32_0 = arith.constant 0 : i32
    %c0_i32_1 = arith.constant 0 : i32
    %c0_i32_2 = arith.constant 0 : i32
    return %arg0, %c0_i32, %c0_i32_0, %c0_i32_1 : i32, i32, i32, i32
  }
  func.func @transform_1(%arg0: i32) -> (i32, i32) {
    %c0_i32 = arith.constant 0 : i32
    %c0_i32_0 = arith.constant 0 : i32
    %c0_i32_1 = arith.constant 0 : i32
    return %c0_i32, %c0_i32_0 : i32, i32
  }
  func.func @transform_2(%arg0: i32) -> (i32, i32) {
    %c0_i32 = arith.constant 0 : i32
    %c0_i32_0 = arith.constant 0 : i32
    %c0_i32_1 = arith.constant 0 : i32
    return %c0_i32, %c0_i32_0 : i32, i32
  }
  func.func @transform_3(%arg0: i32) -> (i32, i32) {
    %c0_i32 = arith.constant 0 : i32
    %c0_i32_0 = arith.constant 0 : i32
    %c0_i32_1 = arith.constant 0 : i32
    return %c0_i32, %c0_i32_0 : i32, i32
  }
  func.func @transform_4(%arg0: i32) -> (i32, i32, i32) {
    %c0_i32 = arith.constant 0 : i32
    %c0_i32_0 = arith.constant 0 : i32
    %c0_i32_1 = arith.constant 0 : i32
    return %arg0, %c0_i32, %c0_i32_0 : i32, i32, i32
  }
}

</mosaic_0001>

<llo_original>
// kernel: patch_merging.1
$region0: #{patch_merging.1}
  #allocation0 [shape = 'u32[]', space=smem, size = 0x4, offset = 0x4, fixed_abs, tag = 'smem constant byte address 0x4 - core index']
  #allocation1 [shape = 'u32[144,128]{1,0:T(1,128)}', space=vmem, size = 0x12000, scoped, tag = 'internal scratch']
  %s0 = inlined_call_operand.vmem [shape: f32[16,2,3,128], index: 0, kind: input, shape index: {}]
  %s1 = inlined_call_operand.vmem [shape: bf16[128,128], index: 1, kind: input, shape index: {}]
  %s2 = inlined_call_operand.vmem [shape: bf16[128,128], index: 2, kind: input, shape index: {}]
  %s3 = inlined_call_operand.vmem [shape: f32[1,128], index: 3, kind: input, shape index: {}]
  %s4 = inlined_call_operand.vmem [shape: f32[16,3,128], index: 4, kind: output, shape index: {}]
  %s5 = sld [smem:[#allocation0]]
  $region49: #{patch_merging.1} parent=0
    _
  %s7 = ssub.s32 1, %s5
  %s8 = scalar_select 0, %s7, %s5
  loop: start=0, step=1, limit=6
  $region2: #{patch_merging.1} parent=0 // loop_pre_header
    _
  $region3: #{patch_merging.1} parent=0 // loop_header
    %s10 = sphi 0, %s14
    %p11 = scmp.ge.s32.totalorder %s10, 6
    %s20 = sphi 0, %s22
    %s23 = sphi 0, %s20
    %s24 = sphi 0, %s23
    %s40 = sphi 0, %s24
    %s44 = sphi 0, %s44
    %s46 = sphi 0, %s44
    %s47 = sphi 0, %s46
    %s61 = sphi 0, %s47
    %s65 = sphi 0, %s65
    %s67 = sphi 0, %s65
    %s68 = sphi 0, %s67
    %s82 = sphi 0, %s68
    %s86 = sphi 0, %s86
    %s88 = sphi 0, %s86
    %s89 = sphi 0, %s88
    %s103 = sphi 0, %s89
    %s109 = sphi 0, %s111
    %s112 = sphi 0, %s109
    %s113 = sphi 0, %s112
    %s129 = sphi 0, %s113
  $region4: #{patch_merging.1} parent=0 // loop_header_branch
    %13 = sbr.rel (%p11) target = $region8
  $region5: #{patch_merging.1} parent=0 // loop_body
    %s15 = ssub.s32 %s10, 1
    %s16 = ssub.s32 %s10, 2
    %s17 = sadd.s32 %s10, 1
    %s18 = ssub.s32 %s10, %s17
    %p19 = scmp.eq.s32.totalorder %s18, 0
    %s21 = sadd.s32 %s20, 1
    %s22 = scalar_select %p19, %s20, %s21
    %p25 = pneg %p19
    %p26 = scmp.eq.s32.totalorder %s10, 3
    %p27 = por %p25, %p26
    %p28 = scmp.ne.s32.totalorder %s20, %s23
    %p29 = scmp.eq.s32.totalorder %s10, 0
    %p30 = por %p28, %p29
    %p31 = scmp.ne.s32.totalorder %s20, %s23
    %p32 = scmp.eq.s32.totalorder %s15, 3
    %p33 = por %p31, %p32
    %p34 = scmp.ne.s32.totalorder %s23, %s24
    %p35 = scmp.eq.s32.totalorder %s15, 0
    %p36 = por %p34, %p35
    %p37 = scmp.ne.s32.totalorder %s23, %s24
    %p38 = scmp.eq.s32.totalorder %s16, 3
    %p39 = por %p37, %p38
    %p41 = scmp.ne.s32.totalorder %s24, %s40
    %p42 = scmp.eq.s32.totalorder %s16, 0
    %p43 = por %p41, %p42
    %s45 = sadd.s32 %s44, 1
    %p48 = scmp.eq.s32.totalorder %s10, 3
    %p49 = scmp.ne.s32.totalorder %s44, %s46
    %p50 = scmp.eq.s32.totalorder %s10, 0
    %p51 = por %p49, %p50
    %p52 = scmp.ne.s32.totalorder %s44, %s46
    %p53 = scmp.eq.s32.totalorder %s15, 3
    %p54 = por %p52, %p53
    %p55 = scmp.ne.s32.totalorder %s46, %s47
    %p56 = scmp.eq.s32.totalorder %s15, 0
    %p57 = por %p55, %p56
    %p58 = scmp.ne.s32.totalorder %s46, %s47
    %p59 = scmp.eq.s32.totalorder %s16, 3
    %p60 = por %p58, %p59
    %p62 = scmp.ne.s32.totalorder %s47, %s61
    %p63 = scmp.eq.s32.totalorder %s16, 0
    %p64 = por %p62, %p63
    %s66 = sadd.s32 %s65, 1
    %p69 = scmp.eq.s32.totalorder %s10, 3
    %p70 = scmp.ne.s32.totalorder %s65, %s67
    %p71 = scmp.eq.s32.totalorder %s10, 0
    %p72 = por %p70, %p71
    %p73 = scmp.ne.s32.totalorder %s65, %s67
    %p74 = scmp.eq.s32.totalorder %s15, 3
    %p75 = por %p73, %p74
    %p76 = scmp.ne.s32.totalorder %s67, %s68
    %p77 = scmp.eq.s32.totalorder %s15, 0
    %p78 = por %p76, %p77
    %p79 = scmp.ne.s32.totalorder %s67, %s68
    %p80 = scmp.eq.s32.totalorder %s16, 3
    %p81 = por %p79, %p80
    %p83 = scmp.ne.s32.totalorder %s68, %s82
    %p84 = scmp.eq.s32.totalorder %s16, 0
    %p85 = por %p83, %p84
    %s87 = sadd.s32 %s86, 1
    %p90 = scmp.eq.s32.totalorder %s10, 3
    %p91 = scmp.ne.s32.totalorder %s86, %s88
    %p92 = scmp.eq.s32.totalorder %s10, 0
    %p93 = por %p91, %p92
    %p94 = scmp.ne.s32.totalorder %s86, %s88
    %p95 = scmp.eq.s32.totalorder %s15, 3
    %p96 = por %p94, %p95
    %p97 = scmp.ne.s32.totalorder %s88, %s89
    %p98 = scmp.eq.s32.totalorder %s15, 0
    %p99 = por %p97, %p98
    %p100 = scmp.ne.s32.totalorder %s88, %s89
    %p101 = scmp.eq.s32.totalorder %s16, 3
    %p102 = por %p100, %p101
    %p104 = scmp.ne.s32.totalorder %s89, %s103
    %p105 = scmp.eq.s32.totalorder %s16, 0
    %p106 = por %p104, %p105
    %s107 = ssub.s32 %s10, %s17
    %p108 = scmp.eq.s32.totalorder %s107, 0
    %s110 = sadd.s32 %s109, 1
    %s111 = scalar_select %p108, %s109, %s110
    %p114 = pneg %p108
    %p115 = scmp.eq.s32.totalorder %s10, 3
    %p116 = por %p114, %p115
    %p117 = scmp.ne.s32.totalorder %s109, %s112
    %p118 = scmp.eq.s32.totalorder %s10, 0
    %p119 = por %p117, %p118
    %p120 = scmp.ne.s32.totalorder %s109, %s112
    %p121 = scmp.eq.s32.totalorder %s15, 3
    %p122 = por %p120, %p121
    %p123 = scmp.ne.s32.totalorder %s112, %s113
    %p124 = scmp.eq.s32.totalorder %s15, 0
    %p125 = por %p123, %p124
    %p126 = scmp.ne.s32.totalorder %s112, %s113
    %p127 = scmp.eq.s32.totalorder %s16, 3
    %p128 = por %p126, %p127
    %p130 = scmp.ne.s32.totalorder %s113, %s129
    %p131 = scmp.eq.s32.totalorder %s16, 0
    %p132 = por %p130, %p131
    %p133 = scmp.le.s32.totalorder 1, %s10
    %p134 = scmp.lt.s32.totalorder %s10, 5
    %p135 = pnand %p133, %p134
    %p136 = pneg %p135
    // Predicated region
    $region9: #{patch_merging.1} parent=5 // pred_check
      _
    $region10: #{patch_merging.1} parent=5 // pred_check_branch
      %138 = sbr.rel (%p135) target = $region12
    $region11: #{patch_merging.1} parent=5 // pred_region
      %s139 = ssub.s32 %s10, 1
      // Predicated region
      $region13: #{patch_merging.1} parent=11 // pred_check
        %p140 = pneg %p57
      $region14: #{patch_merging.1} parent=11 // pred_check_branch
        %142 = sbr.rel (%p140) target = $region16
      $region15: #{patch_merging.1} parent=11 // pred_region
        _
      $region16: #{patch_merging.1} parent=11 // pred_fallthru
        _
      // Predicated region
      $region17: #{patch_merging.1} parent=11 // pred_check
        %p143 = pneg %p78
      $region18: #{patch_merging.1} parent=11 // pred_check_branch
        %145 = sbr.rel (%p143) target = $region20
      $region19: #{patch_merging.1} parent=11 // pred_region
        _
      $region20: #{patch_merging.1} parent=11 // pred_fallthru
        _
      // Predicated region
      $region21: #{patch_merging.1} parent=11 // pred_check
        %p146 = pneg %p99
      $region22: #{patch_merging.1} parent=11 // pred_check_branch
        %148 = sbr.rel (%p146) target = $region24
      $region23: #{patch_merging.1} parent=11 // pred_region
        _
      $region24: #{patch_merging.1} parent=11 // pred_fallthru
        _
    $region12: #{patch_merging.1} parent=5 // pred_fallthru
      _
    %p149 = scmp.lt.s32.totalorder %s10, 4
    // Predicated region
    $region25: #{patch_merging.1} parent=5 // pred_check
      %p150 = pneg %p149
    $region26: #{patch_merging.1} parent=5 // pred_check_branch
      %152 = sbr.rel (%p150) target = $region28
    $region27: #{patch_merging.1} parent=5 // pred_region
      // Predicated region
      $region29: #{patch_merging.1} parent=27 // pred_check
        %p153 = pneg %p30
      $region30: #{patch_merging.1} parent=27 // pred_check_branch
        %155 = sbr.rel (%p153) target = $region32
      $region31: #{patch_merging.1} parent=27 // pred_region
        %s156 = smul.u32 4, %s10
        %p157 = scmp.lt.s32.totalorder %s156, 15
        %s158 = scalar_select %p157, %s156, 15
        %s159 = smul.addr %s158, 2
        %s160 = smul.addr %s159, 4
        %s161 = scalar_lea.vmem %s0, %s160
        %s162 = smul.u32 4, %s10
      $region32: #{patch_merging.1} parent=27 // pred_fallthru
        _
    $region28: #{patch_merging.1} parent=5 // pred_fallthru
      _
    %p163 = scmp.le.s32.totalorder 1, %s10
    %p164 = scmp.lt.s32.totalorder %s10, 5
    %p165 = pnand %p163, %p164
    %p166 = pneg %p165
    // Predicated region
    $region33: #{patch_merging.1} parent=5 // pred_check
      _
    $region34: #{patch_merging.1} parent=5 // pred_check_branch
      %168 = sbr.rel (%p165) target = $region36
    $region35: #{patch_merging.1} parent=5 // pred_region
      %s169 = ssub.s32 %s10, 1
      %s170 = smul.u32 4, %s15
      %p171 = scmp.lt.s32.totalorder %s170, 15
      %s172 = scalar_select %p171, %s170, 15
      %s173 = smul.addr %s172, 2
      %s174 = smul.addr %s173, 4
      %s175 = scalar_lea.vmem %s0, %s174
      %p176 = pneg %p36
      %p177 = pneg %p33
      %p178 = pneg %p57
      %p179 = pneg %p54
      %p180 = pneg %p78
      %p181 = pneg %p75
      %p182 = pneg %p99
      %p183 = pneg %p96
      %p184 = pneg %p125
      %p185 = pneg %p122
      %s186 = smul.u32 4, %s15
      %p187 = scmp.lt.s32.totalorder %s186, 15
      %s188 = scalar_select %p187, %s186, 15
      %s189 = smul.addr %s188, 4
      %s190 = scalar_lea.vmem %s4, %s189
      %s191 = smul.u32 4, %s15
      %p192 = scmp.lt.s32.totalorder %s191, 15
      %s193 = scalar_select %p192, %s191, 15
      %s194 = smul.addr %s193, 2
      %s195 = smul.addr %s194, 4
      %s196 = scalar_lea.vmem %s0, %s195
      %s197 = smul.u32 4, %s15
      %s198 = smul.u32 4, %s15
      %p199 = scmp.lt.s32.totalorder %s198, 15
      %s200 = scalar_select %p199, %s198, 15
      %s201 = smul.addr %s200, 4
      %s202 = scalar_lea.vmem %s4, %s201
      %s203 = smul.u32 4, %s15
      %v205 = vld [vmem:[%s196] sm:$0x7]
      %v206 = vld [vmem:[%s196 + $0x4] sm:$0x7]
      %v207 = vld [vmem:[%s196 + $0x8] sm:$0x7]
      %v208 = vld [vmem:[%s196 + $0xc] sm:$0x7]
      %v209 = vld [vmem:[%s196 + $0x10] sm:$0x7]
      %v210 = vld [vmem:[%s196 + $0x14] sm:$0x7]
      %v211 = vld [vmem:[%s196 + $0x18] sm:$0x7]
      %v212 = vld [vmem:[%s196 + $0x1c] sm:$0x7]
      %v218 = vunpack.c.l.s4 1966171168
      %v219 = vunpack.c.0.s8 %v218
      %v220 = vlaneseq
      %v221 = vshrl.u32 %v220, 7
      %v222 = vsub.s32 %v219, %v221
      %v223 = vrot.slane %v205, %v222
      %v224 = vcombine.high %v223, %v223
      %v226 = vunpack.c.l.s4 1966171168
      %v227 = vunpack.c.0.s8 %v226
      %v228 = vlaneseq
      %v229 = vshrl.u32 %v228, 7
      %v230 = vsub.s32 %v227, %v229
      %v231 = vrot.slane %v223, %v230
      %v233 = vunpack.c.l.s4 1966171168
      %v234 = vunpack.c.0.s8 %v233
      %v235 = vlaneseq
      %v236 = vshrl.u32 %v235, 7
      %v237 = vsub.s32 %v234, %v236
      %v238 = vrot.slane %v224, %v237
      %v239 = vcombine.high %v231, %v231
      %v241 = vunpack.c.l.s4 1966171168
      %v242 = vunpack.c.0.s8 %v241
      %v243 = vlaneseq
      %v244 = vshrl.u32 %v243, 7
      %v245 = vsub.s32 %v242, %v244
      %v246 = vrot.slane %v207, %v245
      %v247 = vcombine.high %v246, %v246
      %v249 = vunpack.c.l.s4 1966171168
      %v250 = vunpack.c.0.s8 %v249
      %v251 = vlaneseq
      %v252 = vshrl.u32 %v251, 7
      %v253 = vsub.s32 %v250, %v252
      %v254 = vrot.slane %v246, %v253
      %v256 = vunpack.c.l.s4 1966171168
      %v257 = vunpack.c.0.s8 %v256
      %v258 = vlaneseq
      %v259 = vshrl.u32 %v258, 7
      %v260 = vsub.s32 %v257, %v259
      %v261 = vrot.slane %v247, %v260
      %v262 = vcombine.high %v254, %v254
      %v264 = vunpack.c.l.s4 1966171168
      %v265 = vunpack.c.0.s8 %v264
      %v266 = vlaneseq
      %v267 = vshrl.u32 %v266, 7
      %v268 = vsub.s32 %v265, %v267
      %v269 = vrot.slane %v209, %v268
      %v270 = vcombine.high %v269, %v269
      %v272 = vunpack.c.l.s4 1966171168
      %v273 = vunpack.c.0.s8 %v272
      %v274 = vlaneseq
      %v275 = vshrl.u32 %v274, 7
      %v276 = vsub.s32 %v273, %v275
      %v277 = vrot.slane %v269, %v276
      %v279 = vunpack.c.l.s4 1966171168
      %v280 = vunpack.c.0.s8 %v279
      %v281 = vlaneseq
      %v282 = vshrl.u32 %v281, 7
      %v283 = vsub.s32 %v280, %v282
      %v284 = vrot.slane %v270, %v283
      %v285 = vcombine.high %v277, %v277
      %v287 = vunpack.c.l.s4 1966171168
      %v288 = vunpack.c.0.s8 %v287
      %v289 = vlaneseq
      %v290 = vshrl.u32 %v289, 7
      %v291 = vsub.s32 %v288, %v290
      %v292 = vrot.slane %v211, %v291
      %v293 = vcombine.high %v292, %v292
      %v295 = vunpack.c.l.s4 1966171168
      %v296 = vunpack.c.0.s8 %v295
      %v297 = vlaneseq
      %v298 = vshrl.u32 %v297, 7
      %v299 = vsub.s32 %v296, %v298
      %v300 = vrot.slane %v292, %v299
      %v302 = vunpack.c.l.s4 1966171168
      %v303 = vunpack.c.0.s8 %v302
      %v304 = vlaneseq
      %v305 = vshrl.u32 %v304, 7
      %v306 = vsub.s32 %v303, %v305
      %v307 = vrot.slane %v293, %v306
      %v308 = vcombine.high %v300, %v300
      %v326 = vunpack.c.l.s4 1966171168
      %v327 = vunpack.c.0.s8 %v326
      %v328 = vlaneseq
      %v329 = vshrl.u32 %v328, 7
      %v330 = vsub.s32 %v327, %v329
      %v331 = vrot.slane %v206, %v330
      %v332 = vcombine.high %v331, %v331
      %v334 = vunpack.c.l.s4 1966171168
      %v335 = vunpack.c.0.s8 %v334
      %v336 = vlaneseq
      %v337 = vshrl.u32 %v336, 7
      %v338 = vsub.s32 %v335, %v337
      %v339 = vrot.slane %v331, %v338
      %v341 = vunpack.c.l.s4 1966171168
      %v342 = vunpack.c.0.s8 %v341
      %v343 = vlaneseq
      %v344 = vshrl.u32 %v343, 7
      %v345 = vsub.s32 %v342, %v344
      %v346 = vrot.slane %v332, %v345
      %v347 = vcombine.high %v339, %v339
      %v349 = vunpack.c.l.s4 1966171168
      %v350 = vunpack.c.0.s8 %v349
      %v351 = vlaneseq
      %v352 = vshrl.u32 %v351, 7
      %v353 = vsub.s32 %v350, %v352
      %v354 = vrot.slane %v208, %v353
      %v355 = vcombine.high %v354, %v354
      %v357 = vunpack.c.l.s4 1966171168
      %v358 = vunpack.c.0.s8 %v357
      %v359 = vlaneseq
      %v360 = vshrl.u32 %v359, 7
      %v361 = vsub.s32 %v358, %v360
      %v362 = vrot.slane %v354, %v361
      %v364 = vunpack.c.l.s4 1966171168
      %v365 = vunpack.c.0.s8 %v364
      %v366 = vlaneseq
      %v367 = vshrl.u32 %v366, 7
      %v368 = vsub.s32 %v365, %v367
      %v369 = vrot.slane %v355, %v368
      %v370 = vcombine.high %v362, %v362
      %v372 = vunpack.c.l.s4 1966171168
      %v373 = vunpack.c.0.s8 %v372
      %v374 = vlaneseq
      %v375 = vshrl.u32 %v374, 7
      %v376 = vsub.s32 %v373, %v375
      %v377 = vrot.slane %v210, %v376
      %v378 = vcombine.high %v377, %v377
      %v380 = vunpack.c.l.s4 1966171168
      %v381 = vunpack.c.0.s8 %v380
      %v382 = vlaneseq
      %v383 = vshrl.u32 %v382, 7
      %v384 = vsub.s32 %v381, %v383
      %v385 = vrot.slane %v377, %v384
      %v387 = vunpack.c.l.s4 1966171168
      %v388 = vunpack.c.0.s8 %v387
      %v389 = vlaneseq
      %v390 = vshrl.u32 %v389, 7
      %v391 = vsub.s32 %v388, %v390
      %v392 = vrot.slane %v378, %v391
      %v393 = vcombine.high %v385, %v385
      %v395 = vunpack.c.l.s4 1966171168
      %v396 = vunpack.c.0.s8 %v395
      %v397 = vlaneseq
      %v398 = vshrl.u32 %v397, 7
      %v399 = vsub.s32 %v396, %v398
      %v400 = vrot.slane %v212, %v399
      %v401 = vcombine.high %v400, %v400
      %v403 = vunpack.c.l.s4 1966171168
      %v404 = vunpack.c.0.s8 %v403
      %v405 = vlaneseq
      %v406 = vshrl.u32 %v405, 7
      %v407 = vsub.s32 %v404, %v406
      %v408 = vrot.slane %v400, %v407
      %v410 = vunpack.c.l.s4 1966171168
      %v411 = vunpack.c.0.s8 %v410
      %v412 = vlaneseq
      %v413 = vshrl.u32 %v412, 7
      %v414 = vsub.s32 %v411, %v413
      %v415 = vrot.slane %v401, %v414
      %v416 = vcombine.high %v408, %v408
      %v429 = vcombine.low %v231, %v238
      %v430 = vcombine.low %v239, %v254
      %v431 = vcombine.low %v261, %v262
      %v432 = vcombine.low %v277, %v284
      %v434 = vunpack.c.l.s4 1966171168
      %v435 = vunpack.c.0.s8 %v434
      %v436 = vlaneseq
      %v437 = vshrl.u32 %v436, 7
      %v438 = vsub.s32 %v435, %v437
      %v439 = vrot.slane %v429, %v438
      %v441 = vunpack.c.l.s4 1966171168
      %v442 = vunpack.c.0.s8 %v441
      %v443 = vlaneseq
      %v444 = vshrl.u32 %v443, 7
      %v445 = vsub.s32 %v442, %v444
      %v446 = vrot.slane %v430, %v445
      %v448 = vunpack.c.l.s4 1966171168
      %v449 = vunpack.c.0.s8 %v448
      %v450 = vlaneseq
      %v451 = vshrl.u32 %v450, 7
      %v452 = vsub.s32 %v449, %v451
      %v453 = vrot.slane %v431, %v452
      %v455 = vunpack.c.l.s4 1966171168
      %v456 = vunpack.c.0.s8 %v455
      %v457 = vlaneseq
      %v458 = vshrl.u32 %v457, 7
      %v459 = vsub.s32 %v456, %v458
      %v460 = vrot.slane %v432, %v459
      %v461 = vcombine.low %v439, %v446
      %v462 = vcombine.low %v453, %v460
      %v464 = vunpack.c.l.s4 1966171168
      %v465 = vunpack.c.0.s8 %v464
      %v466 = vlaneseq
      %v467 = vshrl.u32 %v466, 7
      %v468 = vsub.s32 %v465, %v467
      %v469 = vrot.slane %v461, %v468
      %v471 = vunpack.c.l.s4 1966171168
      %v472 = vunpack.c.0.s8 %v471
      %v473 = vlaneseq
      %v474 = vshrl.u32 %v473, 7
      %v475 = vsub.s32 %v472, %v474
      %v476 = vrot.slane %v462, %v475
      %v477 = vcombine.low %v469, %v476
      %v478 = vcombine.low %v285, %v300
      %v479 = vcombine.low %v307, %v308
      %v481 = vunpack.c.l.s4 1966171168
      %v482 = vunpack.c.0.s8 %v481
      %v483 = vlaneseq
      %v484 = vshrl.u32 %v483, 7
      %v485 = vsub.s32 %v482, %v484
      %v486 = vrot.slane %v478, %v485
      %v488 = vunpack.c.l.s4 1966171168
      %v489 = vunpack.c.0.s8 %v488
      %v490 = vlaneseq
      %v491 = vshrl.u32 %v490, 7
      %v492 = vsub.s32 %v489, %v491
      %v493 = vrot.slane %v479, %v492
      %v494 = vcombine.low %v486, %v493
      %v496 = vunpack.c.l.s4 1966171168
      %v497 = vunpack.c.0.s8 %v496
      %v498 = vlaneseq
      %v499 = vshrl.u32 %v498, 7
      %v500 = vsub.s32 %v497, %v499
      %v501 = vrot.slane %v494, %v500
      %504 = vadd.xlane.f32.xlu0 %v477
      %v505 = vpop.xlane.xlu0 %504
      %vm506 = vcmask 1043456
      %v507 = vsel %vm506, %v501, 0.0
      %508 = vadd.xlane.f32.xlu0 %v507
      %v509 = vpop.xlane.xlu0 %508
      %v510 = vcombine.low %v339, %v346
      %v511 = vcombine.low %v347, %v362
      %v512 = vcombine.low %v369, %v370
      %v513 = vcombine.low %v385, %v392
      %v515 = vunpack.c.l.s4 1966171168
      %v516 = vunpack.c.0.s8 %v515
      %v517 = vlaneseq
      %v518 = vshrl.u32 %v517, 7
      %v519 = vsub.s32 %v516, %v518
      %v520 = vrot.slane %v510, %v519
      %v522 = vunpack.c.l.s4 1966171168
      %v523 = vunpack.c.0.s8 %v522
      %v524 = vlaneseq
      %v525 = vshrl.u32 %v524, 7
      %v526 = vsub.s32 %v523, %v525
      %v527 = vrot.slane %v511, %v526
      %v529 = vunpack.c.l.s4 1966171168
      %v530 = vunpack.c.0.s8 %v529
      %v531 = vlaneseq
      %v532 = vshrl.u32 %v531, 7
      %v533 = vsub.s32 %v530, %v532
      %v534 = vrot.slane %v512, %v533
      %v536 = vunpack.c.l.s4 1966171168
      %v537 = vunpack.c.0.s8 %v536
      %v538 = vlaneseq
      %v539 = vshrl.u32 %v538, 7
      %v540 = vsub.s32 %v537, %v539
      %v541 = vrot.slane %v513, %v540
      %v542 = vcombine.low %v520, %v527
      %v543 = vcombine.low %v534, %v541
      %v545 = vunpack.c.l.s4 1966171168
      %v546 = vunpack.c.0.s8 %v545
      %v547 = vlaneseq
      %v548 = vshrl.u32 %v547, 7
      %v549 = vsub.s32 %v546, %v548
      %v550 = vrot.slane %v542, %v549
      %v552 = vunpack.c.l.s4 1966171168
      %v553 = vunpack.c.0.s8 %v552
      %v554 = vlaneseq
      %v555 = vshrl.u32 %v554, 7
      %v556 = vsub.s32 %v553, %v555
      %v557 = vrot.slane %v543, %v556
      %v558 = vcombine.low %v550, %v557
      %v559 = vcombine.low %v393, %v408
      %v560 = vcombine.low %v415, %v416
      %v562 = vunpack.c.l.s4 1966171168
      %v563 = vunpack.c.0.s8 %v562
      %v564 = vlaneseq
      %v565 = vshrl.u32 %v564, 7
      %v566 = vsub.s32 %v563, %v565
      %v567 = vrot.slane %v559, %v566
      %v569 = vunpack.c.l.s4 1966171168
      %v570 = vunpack.c.0.s8 %v569
      %v571 = vlaneseq
      %v572 = vshrl.u32 %v571, 7
      %v573 = vsub.s32 %v570, %v572
      %v574 = vrot.slane %v560, %v573
      %v575 = vcombine.low %v567, %v574
      %v577 = vunpack.c.l.s4 1966171168
      %v578 = vunpack.c.0.s8 %v577
      %v579 = vlaneseq
      %v580 = vshrl.u32 %v579, 7
      %v581 = vsub.s32 %v578, %v580
      %v582 = vrot.slane %v575, %v581
      %585 = vadd.xlane.f32.xlu0 %v558
      %v586 = vpop.xlane.xlu0 %585
      %v587 = vsel %vm506, %v582, 0.0
      %588 = vadd.xlane.f32.xlu0 %v587
      %v589 = vpop.xlane.xlu0 %588
      %v590 = vadd.f32 %v505, %v586
      %v591 = vadd.f32 %v509, %v589
      %v592 = vmul.f32 %v231, %v231
      %v593 = vmul.f32 %v238, %v238
      %v594 = vmul.f32 %v239, %v239
      %v595 = vmul.f32 %v254, %v254
      %v596 = vmul.f32 %v261, %v261
      %v597 = vmul.f32 %v262, %v262
      %v598 = vmul.f32 %v277, %v277
      %v599 = vmul.f32 %v284, %v284
      %v600 = vmul.f32 %v285, %v285
      %v601 = vmul.f32 %v300, %v300
      %v602 = vmul.f32 %v307, %v307
      %v603 = vmul.f32 %v308, %v308
      %v616 = vcombine.low %v592, %v593
      %v617 = vcombine.low %v594, %v595
      %v618 = vcombine.low %v596, %v597
      %v619 = vcombine.low %v598, %v599
      %v621 = vunpack.c.l.s4 1966171168
      %v622 = vunpack.c.0.s8 %v621
      %v623 = vlaneseq
      %v624 = vshrl.u32 %v623, 7
      %v625 = vsub.s32 %v622, %v624
      %v626 = vrot.slane %v616, %v625
      %v628 = vunpack.c.l.s4 1966171168
      %v629 = vunpack.c.0.s8 %v628
      %v630 = vlaneseq
      %v631 = vshrl.u32 %v630, 7
      %v632 = vsub.s32 %v629, %v631
      %v633 = vrot.slane %v617, %v632
      %v635 = vunpack.c.l.s4 1966171168
      %v636 = vunpack.c.0.s8 %v635
      %v637 = vlaneseq
      %v638 = vshrl.u32 %v637, 7
      %v639 = vsub.s32 %v636, %v638
      %v640 = vrot.slane %v618, %v639
      %v642 = vunpack.c.l.s4 1966171168
      %v643 = vunpack.c.0.s8 %v642
      %v644 = vlaneseq
      %v645 = vshrl.u32 %v644, 7
      %v646 = vsub.s32 %v643, %v645
      %v647 = vrot.slane %v619, %v646
      %v648 = vcombine.low %v626, %v633
      %v649 = vcombine.low %v640, %v647
      %v651 = vunpack.c.l.s4 1966171168
      %v652 = vunpack.c.0.s8 %v651
      %v653 = vlaneseq
      %v654 = vshrl.u32 %v653, 7
      %v655 = vsub.s32 %v652, %v654
      %v656 = vrot.slane %v648, %v655
      %v658 = vunpack.c.l.s4 1966171168
      %v659 = vunpack.c.0.s8 %v658
      %v660 = vlaneseq
      %v661 = vshrl.u32 %v660, 7
      %v662 = vsub.s32 %v659, %v661
      %v663 = vrot.slane %v649, %v662
      %v664 = vcombine.low %v656, %v663
      %v665 = vcombine.low %v600, %v601
      %v666 = vcombine.low %v602, %v603
      %v668 = vunpack.c.l.s4 1966171168
      %v669 = vunpack.c.0.s8 %v668
      %v670 = vlaneseq
      %v671 = vshrl.u32 %v670, 7
      %v672 = vsub.s32 %v669, %v671
      %v673 = vrot.slane %v665, %v672
      %v675 = vunpack.c.l.s4 1966171168
      %v676 = vunpack.c.0.s8 %v675
      %v677 = vlaneseq
      %v678 = vshrl.u32 %v677, 7
      %v679 = vsub.s32 %v676, %v678
      %v680 = vrot.slane %v666, %v679
      %v681 = vcombine.low %v673, %v680
      %v683 = vunpack.c.l.s4 1966171168
      %v684 = vunpack.c.0.s8 %v683
      %v685 = vlaneseq
      %v686 = vshrl.u32 %v685, 7
      %v687 = vsub.s32 %v684, %v686
      %v688 = vrot.slane %v681, %v687
      %691 = vadd.xlane.f32.xlu0 %v664
      %v692 = vpop.xlane.xlu0 %691
      %v693 = vsel %vm506, %v688, 0.0
      %694 = vadd.xlane.f32.xlu0 %v693
      %v695 = vpop.xlane.xlu0 %694
      %v696 = vmul.f32 %v339, %v339
      %v697 = vmul.f32 %v346, %v346
      %v698 = vmul.f32 %v347, %v347
      %v699 = vmul.f32 %v362, %v362
      %v700 = vmul.f32 %v369, %v369
      %v701 = vmul.f32 %v370, %v370
      %v702 = vmul.f32 %v385, %v385
      %v703 = vmul.f32 %v392, %v392
      %v704 = vmul.f32 %v393, %v393
      %v705 = vmul.f32 %v408, %v408
      %v706 = vmul.f32 %v415, %v415
      %v707 = vmul.f32 %v416, %v416
      %v720 = vcombine.low %v696, %v697
      %v721 = vcombine.low %v698, %v699
      %v722 = vcombine.low %v700, %v701
      %v723 = vcombine.low %v702, %v703
      %v725 = vunpack.c.l.s4 1966171168
      %v726 = vunpack.c.0.s8 %v725
      %v727 = vlaneseq
      %v728 = vshrl.u32 %v727, 7
      %v729 = vsub.s32 %v726, %v728
      %v730 = vrot.slane %v720, %v729
      %v732 = vunpack.c.l.s4 1966171168
      %v733 = vunpack.c.0.s8 %v732
      %v734 = vlaneseq
      %v735 = vshrl.u32 %v734, 7
      %v736 = vsub.s32 %v733, %v735
      %v737 = vrot.slane %v721, %v736
      %v739 = vunpack.c.l.s4 1966171168
      %v740 = vunpack.c.0.s8 %v739
      %v741 = vlaneseq
      %v742 = vshrl.u32 %v741, 7
      %v743 = vsub.s32 %v740, %v742
      %v744 = vrot.slane %v722, %v743
      %v746 = vunpack.c.l.s4 1966171168
      %v747 = vunpack.c.0.s8 %v746
      %v748 = vlaneseq
      %v749 = vshrl.u32 %v748, 7
      %v750 = vsub.s32 %v747, %v749
      %v751 = vrot.slane %v723, %v750
      %v752 = vcombine.low %v730, %v737
      %v753 = vcombine.low %v744, %v751
      %v755 = vunpack.c.l.s4 1966171168
      %v756 = vunpack.c.0.s8 %v755
      %v757 = vlaneseq
      %v758 = vshrl.u32 %v757, 7
      %v759 = vsub.s32 %v756, %v758
      %v760 = vrot.slane %v752, %v759
      %v762 = vunpack.c.l.s4 1966171168
      %v763 = vunpack.c.0.s8 %v762
      %v764 = vlaneseq
      %v765 = vshrl.u32 %v764, 7
      %v766 = vsub.s32 %v763, %v765
      %v767 = vrot.slane %v753, %v766
      %v768 = vcombine.low %v760, %v767
      %v769 = vcombine.low %v704, %v705
      %v770 = vcombine.low %v706, %v707
      %v772 = vunpack.c.l.s4 1966171168
      %v773 = vunpack.c.0.s8 %v772
      %v774 = vlaneseq
      %v775 = vshrl.u32 %v774, 7
      %v776 = vsub.s32 %v773, %v775
      %v777 = vrot.slane %v769, %v776
      %v779 = vunpack.c.l.s4 1966171168
      %v780 = vunpack.c.0.s8 %v779
      %v781 = vlaneseq
      %v782 = vshrl.u32 %v781, 7
      %v783 = vsub.s32 %v780, %v782
      %v784 = vrot.slane %v770, %v783
      %v785 = vcombine.low %v777, %v784
      %v787 = vunpack.c.l.s4 1966171168
      %v788 = vunpack.c.0.s8 %v787
      %v789 = vlaneseq
      %v790 = vshrl.u32 %v789, 7
      %v791 = vsub.s32 %v788, %v790
      %v792 = vrot.slane %v785, %v791
      %795 = vadd.xlane.f32.xlu0 %v768
      %v796 = vpop.xlane.xlu0 %795
      %v797 = vsel %vm506, %v792, 0.0
      %798 = vadd.xlane.f32.xlu0 %v797
      %v799 = vpop.xlane.xlu0 %798
      %v800 = vadd.f32 %v692, %v796
      %v801 = vadd.f32 %v695, %v799
      %v802 = vmul.f32 %v590, 0.00390625
      %v803 = vmul.f32 %v591, 0.00390625
      %v804 = vmul.f32 %v800, 0.00390625
      %v805 = vmul.f32 %v801, 0.00390625
      %v806 = vmul.f32 %v802, %v802
      %v807 = vmul.f32 %v803, %v803
      %v808 = vsub.f32 %v804, %v806
      %v809 = vsub.f32 %v805, %v807
      %v810 = vadd.f32 %v808, 1e-05
      %v811 = vadd.f32 %v809, 1e-05
      %v812 = vrsqrt.pop %v810
      %v813 = vrsqrt.pop %v811
      %v816 = vlaneseq
      %v817 = vshrl.u32 %v816, 7
      %v818 = vsub.s32 0, %v817
      %v819 = vrot.slane %v802, %v818
      %v820 = vlaneseq
      %v821 = vshrl.u32 %v820, 7
      %v822 = vsub.s32 1, %v821
      %v823 = vrot.slane %v802, %v822
      %v824 = vlaneseq
      %v825 = vshrl.u32 %v824, 7
      %v826 = vsub.s32 2, %v825
      %v827 = vrot.slane %v802, %v826
      %v828 = vlaneseq
      %v829 = vshrl.u32 %v828, 7
      %v830 = vsub.s32 3, %v829
      %v831 = vrot.slane %v802, %v830
      %v832 = vlaneseq
      %v833 = vshrl.u32 %v832, 7
      %v834 = vsub.s32 4, %v833
      %v835 = vrot.slane %v802, %v834
      %v836 = vlaneseq
      %v837 = vshrl.u32 %v836, 7
      %v838 = vsub.s32 5, %v837
      %v839 = vrot.slane %v802, %v838
      %v840 = vlaneseq
      %v841 = vshrl.u32 %v840, 7
      %v842 = vsub.s32 6, %v841
      %v843 = vrot.slane %v802, %v842
      %v844 = vlaneseq
      %v845 = vshrl.u32 %v844, 7
      %v846 = vsub.s32 7, %v845
      %v847 = vrot.slane %v802, %v846
      %v848 = vlaneseq
      %v849 = vshrl.u32 %v848, 7
      %v850 = vsub.s32 0, %v849
      %v851 = vrot.slane %v803, %v850
      %v852 = vlaneseq
      %v853 = vshrl.u32 %v852, 7
      %v854 = vsub.s32 1, %v853
      %v855 = vrot.slane %v803, %v854
      %v856 = vlaneseq
      %v857 = vshrl.u32 %v856, 7
      %v858 = vsub.s32 2, %v857
      %v859 = vrot.slane %v803, %v858
      %v860 = vlaneseq
      %v861 = vshrl.u32 %v860, 7
      %v862 = vsub.s32 3, %v861
      %v863 = vrot.slane %v803, %v862
      %v876 = vsub.f32 %v231, %v819
      %v877 = vsub.f32 %v238, %v823
      %v878 = vsub.f32 %v239, %v827
      %v879 = vsub.f32 %v254, %v831
      %v880 = vsub.f32 %v261, %v835
      %v881 = vsub.f32 %v262, %v839
      %v882 = vsub.f32 %v277, %v843
      %v883 = vsub.f32 %v284, %v847
      %v884 = vsub.f32 %v285, %v851
      %v885 = vsub.f32 %v300, %v855
      %v886 = vsub.f32 %v307, %v859
      %v887 = vsub.f32 %v308, %v863
      %v890 = vlaneseq
      %v891 = vshrl.u32 %v890, 7
      %v892 = vsub.s32 0, %v891
      %v893 = vrot.slane %v812, %v892
      %v894 = vlaneseq
      %v895 = vshrl.u32 %v894, 7
      %v896 = vsub.s32 1, %v895
      %v897 = vrot.slane %v812, %v896
      %v898 = vlaneseq
      %v899 = vshrl.u32 %v898, 7
      %v900 = vsub.s32 2, %v899
      %v901 = vrot.slane %v812, %v900
      %v902 = vlaneseq
      %v903 = vshrl.u32 %v902, 7
      %v904 = vsub.s32 3, %v903
      %v905 = vrot.slane %v812, %v904
      %v906 = vlaneseq
      %v907 = vshrl.u32 %v906, 7
      %v908 = vsub.s32 4, %v907
      %v909 = vrot.slane %v812, %v908
      %v910 = vlaneseq
      %v911 = vshrl.u32 %v910, 7
      %v912 = vsub.s32 5, %v911
      %v913 = vrot.slane %v812, %v912
      %v914 = vlaneseq
      %v915 = vshrl.u32 %v914, 7
      %v916 = vsub.s32 6, %v915
      %v917 = vrot.slane %v812, %v916
      %v918 = vlaneseq
      %v919 = vshrl.u32 %v918, 7
      %v920 = vsub.s32 7, %v919
      %v921 = vrot.slane %v812, %v920
      %v922 = vlaneseq
      %v923 = vshrl.u32 %v922, 7
      %v924 = vsub.s32 0, %v923
      %v925 = vrot.slane %v813, %v924
      %v926 = vlaneseq
      %v927 = vshrl.u32 %v926, 7
      %v928 = vsub.s32 1, %v927
      %v929 = vrot.slane %v813, %v928
      %v930 = vlaneseq
      %v931 = vshrl.u32 %v930, 7
      %v932 = vsub.s32 2, %v931
      %v933 = vrot.slane %v813, %v932
      %v934 = vlaneseq
      %v935 = vshrl.u32 %v934, 7
      %v936 = vsub.s32 3, %v935
      %v937 = vrot.slane %v813, %v936
      %v950 = vmul.f32 %v876, %v893
      %v951 = vmul.f32 %v877, %v897
      %v952 = vmul.f32 %v878, %v901
      %v953 = vmul.f32 %v879, %v905
      %v954 = vmul.f32 %v880, %v909
      %v955 = vmul.f32 %v881, %v913
      %v956 = vmul.f32 %v882, %v917
      %v957 = vmul.f32 %v883, %v921
      %v958 = vmul.f32 %v884, %v925
      %v959 = vmul.f32 %v885, %v929
      %v960 = vmul.f32 %v886, %v933
      %v961 = vmul.f32 %v887, %v937
      %v974 = vcombine.low %v950, %v951
      %v975 = vcombine.low %v952, %v953
      %v976 = vcombine.low %v954, %v955
      %v977 = vcombine.low %v956, %v957
      %v979 = vunpack.c.l.s4 1966171168
      %v980 = vunpack.c.0.s8 %v979
      %v981 = vlaneseq
      %v982 = vshrl.u32 %v981, 7
      %v983 = vsub.s32 %v980, %v982
      %v984 = vrot.slane %v974, %v983
      %v986 = vunpack.c.l.s4 1966171168
      %v987 = vunpack.c.0.s8 %v986
      %v988 = vlaneseq
      %v989 = vshrl.u32 %v988, 7
      %v990 = vsub.s32 %v987, %v989
      %v991 = vrot.slane %v975, %v990
      %v993 = vunpack.c.l.s4 1966171168
      %v994 = vunpack.c.0.s8 %v993
      %v995 = vlaneseq
      %v996 = vshrl.u32 %v995, 7
      %v997 = vsub.s32 %v994, %v996
      %v998 = vrot.slane %v976, %v997
      %v1000 = vunpack.c.l.s4 1966171168
      %v1001 = vunpack.c.0.s8 %v1000
      %v1002 = vlaneseq
      %v1003 = vshrl.u32 %v1002, 7
      %v1004 = vsub.s32 %v1001, %v1003
      %v1005 = vrot.slane %v977, %v1004
      %v1006 = vcombine.low %v984, %v991
      %v1007 = vcombine.low %v998, %v1005
      %v1009 = vunpack.c.l.s4 1966171168
      %v1010 = vunpack.c.0.s8 %v1009
      %v1011 = vlaneseq
      %v1012 = vshrl.u32 %v1011, 7
      %v1013 = vsub.s32 %v1010, %v1012
      %v1014 = vrot.slane %v1006, %v1013
      %v1016 = vunpack.c.l.s4 1966171168
      %v1017 = vunpack.c.0.s8 %v1016
      %v1018 = vlaneseq
      %v1019 = vshrl.u32 %v1018, 7
      %v1020 = vsub.s32 %v1017, %v1019
      %v1021 = vrot.slane %v1007, %v1020
      %v1022 = vcombine.low %v1014, %v1021
      %v1023 = vcombine.low %v958, %v959
      %v1024 = vcombine.low %v960, %v961
      %v1026 = vunpack.c.l.s4 1966171168
      %v1027 = vunpack.c.0.s8 %v1026
      %v1028 = vlaneseq
      %v1029 = vshrl.u32 %v1028, 7
      %v1030 = vsub.s32 %v1027, %v1029
      %v1031 = vrot.slane %v1023, %v1030
      %v1033 = vunpack.c.l.s4 1966171168
      %v1034 = vunpack.c.0.s8 %v1033
      %v1035 = vlaneseq
      %v1036 = vshrl.u32 %v1035, 7
      %v1037 = vsub.s32 %v1034, %v1036
      %v1038 = vrot.slane %v1024, %v1037
      %v1039 = vcombine.low %v1031, %v1038
      %v1041 = vunpack.c.l.s4 1966171168
      %v1042 = vunpack.c.0.s8 %v1041
      %v1043 = vlaneseq
      %v1044 = vshrl.u32 %v1043, 7
      %v1045 = vsub.s32 %v1042, %v1044
      %v1046 = vrot.slane %v1039, %v1045
      %v1049 = vpack.c.bf16 %v1046, %v1022
      %v1050 = vsub.f32 %v339, %v819
      %v1051 = vsub.f32 %v346, %v823
      %v1052 = vsub.f32 %v347, %v827
      %v1053 = vsub.f32 %v362, %v831
      %v1054 = vsub.f32 %v369, %v835
      %v1055 = vsub.f32 %v370, %v839
      %v1056 = vsub.f32 %v385, %v843
      %v1057 = vsub.f32 %v392, %v847
      %v1058 = vsub.f32 %v393, %v851
      %v1059 = vsub.f32 %v408, %v855
      %v1060 = vsub.f32 %v415, %v859
      %v1061 = vsub.f32 %v416, %v863
      %v1062 = vmul.f32 %v1050, %v893
      %v1063 = vmul.f32 %v1051, %v897
      %v1064 = vmul.f32 %v1052, %v901
      %v1065 = vmul.f32 %v1053, %v905
      %v1066 = vmul.f32 %v1054, %v909
      %v1067 = vmul.f32 %v1055, %v913
      %v1068 = vmul.f32 %v1056, %v917
      %v1069 = vmul.f32 %v1057, %v921
      %v1070 = vmul.f32 %v1058, %v925
      %v1071 = vmul.f32 %v1059, %v929
      %v1072 = vmul.f32 %v1060, %v933
      %v1073 = vmul.f32 %v1061, %v937
      %v1086 = vcombine.low %v1062, %v1063
      %v1087 = vcombine.low %v1064, %v1065
      %v1088 = vcombine.low %v1066, %v1067
      %v1089 = vcombine.low %v1068, %v1069
      %v1091 = vunpack.c.l.s4 1966171168
      %v1092 = vunpack.c.0.s8 %v1091
      %v1093 = vlaneseq
      %v1094 = vshrl.u32 %v1093, 7
      %v1095 = vsub.s32 %v1092, %v1094
      %v1096 = vrot.slane %v1086, %v1095
      %v1098 = vunpack.c.l.s4 1966171168
      %v1099 = vunpack.c.0.s8 %v1098
      %v1100 = vlaneseq
      %v1101 = vshrl.u32 %v1100, 7
      %v1102 = vsub.s32 %v1099, %v1101
      %v1103 = vrot.slane %v1087, %v1102
      %v1105 = vunpack.c.l.s4 1966171168
      %v1106 = vunpack.c.0.s8 %v1105
      %v1107 = vlaneseq
      %v1108 = vshrl.u32 %v1107, 7
      %v1109 = vsub.s32 %v1106, %v1108
      %v1110 = vrot.slane %v1088, %v1109
      %v1112 = vunpack.c.l.s4 1966171168
      %v1113 = vunpack.c.0.s8 %v1112
      %v1114 = vlaneseq
      %v1115 = vshrl.u32 %v1114, 7
      %v1116 = vsub.s32 %v1113, %v1115
      %v1117 = vrot.slane %v1089, %v1116
      %v1118 = vcombine.low %v1096, %v1103
      %v1119 = vcombine.low %v1110, %v1117
      %v1121 = vunpack.c.l.s4 1966171168
      %v1122 = vunpack.c.0.s8 %v1121
      %v1123 = vlaneseq
      %v1124 = vshrl.u32 %v1123, 7
      %v1125 = vsub.s32 %v1122, %v1124
      %v1126 = vrot.slane %v1118, %v1125
      %v1128 = vunpack.c.l.s4 1966171168
      %v1129 = vunpack.c.0.s8 %v1128
      %v1130 = vlaneseq
      %v1131 = vshrl.u32 %v1130, 7
      %v1132 = vsub.s32 %v1129, %v1131
      %v1133 = vrot.slane %v1119, %v1132
      %v1134 = vcombine.low %v1126, %v1133
      %v1135 = vcombine.low %v1070, %v1071
      %v1136 = vcombine.low %v1072, %v1073
      %v1138 = vunpack.c.l.s4 1966171168
      %v1139 = vunpack.c.0.s8 %v1138
      %v1140 = vlaneseq
      %v1141 = vshrl.u32 %v1140, 7
      %v1142 = vsub.s32 %v1139, %v1141
      %v1143 = vrot.slane %v1135, %v1142
      %v1145 = vunpack.c.l.s4 1966171168
      %v1146 = vunpack.c.0.s8 %v1145
      %v1147 = vlaneseq
      %v1148 = vshrl.u32 %v1147, 7
      %v1149 = vsub.s32 %v1146, %v1148
      %v1150 = vrot.slane %v1136, %v1149
      %v1151 = vcombine.low %v1143, %v1150
      %v1153 = vunpack.c.l.s4 1966171168
      %v1154 = vunpack.c.0.s8 %v1153
      %v1155 = vlaneseq
      %v1156 = vshrl.u32 %v1155, 7
      %v1157 = vsub.s32 %v1154, %v1156
      %v1158 = vrot.slane %v1151, %v1157
      %v1161 = vpack.c.bf16 %v1158, %v1134
      %v1162 = vld [vmem:[%s1] sm:$0xf]
      %v1163 = vld [vmem:[%s1 + $0x4] sm:$0xf]
      %v1164 = vld [vmem:[%s1 + $0x8] sm:$0xf]
      %v1165 = vld [vmem:[%s1 + $0xc] sm:$0xf]
      %v1166 = vld [vmem:[%s1 + $0x10] sm:$0xf]
      %v1167 = vld [vmem:[%s1 + $0x14] sm:$0xf]
      %v1168 = vld [vmem:[%s1 + $0x18] sm:$0xf]
      %v1169 = vld [vmem:[%s1 + $0x1c] sm:$0xf]
      %v1170 = vld [vmem:[%s1 + $0x20] sm:$0xf]
      %v1171 = vld [vmem:[%s1 + $0x24] sm:$0xf]
      %v1172 = vld [vmem:[%s1 + $0x28] sm:$0xf]
      %v1173 = vld [vmem:[%s1 + $0x2c] sm:$0xf]
      %v1174 = vld [vmem:[%s1 + $0x30] sm:$0xf]
      %v1175 = vld [vmem:[%s1 + $0x34] sm:$0xf]
      %v1176 = vld [vmem:[%s1 + $0x38] sm:$0xf]
      %v1177 = vld [vmem:[%s1 + $0x3c] sm:$0xf]
      %v1178 = vld [vmem:[%s2] sm:$0xf]
      %v1179 = vld [vmem:[%s2 + $0x4] sm:$0xf]
      %v1180 = vld [vmem:[%s2 + $0x8] sm:$0xf]
      %v1181 = vld [vmem:[%s2 + $0xc] sm:$0xf]
      %v1182 = vld [vmem:[%s2 + $0x10] sm:$0xf]
      %v1183 = vld [vmem:[%s2 + $0x14] sm:$0xf]
      %v1184 = vld [vmem:[%s2 + $0x18] sm:$0xf]
      %v1185 = vld [vmem:[%s2 + $0x1c] sm:$0xf]
      %v1186 = vld [vmem:[%s2 + $0x20] sm:$0xf]
      %v1187 = vld [vmem:[%s2 + $0x24] sm:$0xf]
      %v1188 = vld [vmem:[%s2 + $0x28] sm:$0xf]
      %v1189 = vld [vmem:[%s2 + $0x2c] sm:$0xf]
      %v1190 = vld [vmem:[%s2 + $0x30] sm:$0xf]
      %v1191 = vld [vmem:[%s2 + $0x34] sm:$0xf]
      %v1192 = vld [vmem:[%s2 + $0x38] sm:$0xf]
      %v1193 = vld [vmem:[%s2 + $0x3c] sm:$0xf]
      %v1210 = vunpack.c.l.b16 %v1178
      %v1211 = vunpack.c.l.b16 %v1179
      %v1212 = vunpack.c.l.b16 %v1180
      %v1213 = vunpack.c.l.b16 %v1181
      %v1214 = vunpack.c.l.b16 %v1182
      %v1215 = vunpack.c.l.b16 %v1183
      %v1216 = vunpack.c.l.b16 %v1184
      %v1217 = vunpack.c.l.b16 %v1185
      %v1218 = vunpack.c.l.b16 %v1186
      %v1219 = vunpack.c.l.b16 %v1187
      %v1220 = vunpack.c.l.b16 %v1188
      %v1221 = vunpack.c.l.b16 %v1189
      %v1222 = vunpack.c.l.b16 %v1190
      %v1223 = vunpack.c.l.b16 %v1191
      %v1224 = vunpack.c.l.b16 %v1192
      %v1225 = vunpack.c.l.b16 %v1193
      %v1226 = vpack.c.b16 %v1211, %v1210
      %v1227 = vpack.c.b16 %v1213, %v1212
      %v1228 = vpack.c.b16 %v1215, %v1214
      %v1229 = vpack.c.b16 %v1217, %v1216
      %v1230 = vpack.c.b16 %v1219, %v1218
      %v1231 = vpack.c.b16 %v1221, %v1220
      %v1232 = vpack.c.b16 %v1223, %v1222
      %v1233 = vpack.c.b16 %v1225, %v1224
      %1242 = vmatprep.subr.bf16.mxu0 0
      %1243 = vmatpush1.bf16.msra.mxu0 %v1226
      %1244 = vmatprep.subr.bf16.mxu0 0
      %1245 = vmatpush1.bf16.msra.mxu0 %v1227
      %1246 = vmatprep.subr.bf16.mxu0 0
      %1247 = vmatpush1.bf16.msra.mxu0 %v1228
      %1248 = vmatprep.subr.bf16.mxu0 0
      %1249 = vmatpush1.bf16.msra.mxu0 %v1229
      %1250 = vmatprep.subr.bf16.mxu0 0
      %1251 = vmatpush1.bf16.msra.mxu0 %v1230
      %1252 = vmatprep.subr.bf16.mxu0 0
      %1253 = vmatpush1.bf16.msra.mxu0 %v1231
      %1254 = vmatprep.subr.bf16.mxu0 0
      %1255 = vmatpush1.bf16.msra.mxu0 %v1232
      %1256 = vmatprep.subr.bf16.mxu0 0
      %1257 = vmatpush1.bf16.msra.mxu0 %v1233
      %1258 = vmatprep.subr.bf16.mxu0 0
      %1259 = vmatpush1.bf16.msra.mxu0 0
      %1260 = vmatprep.subr.bf16.mxu0 0
      %1261 = vmatpush1.bf16.msra.mxu0 0
      %1262 = vmatprep.subr.bf16.mxu0 0
      %1263 = vmatpush1.bf16.msra.mxu0 0
      %1264 = vmatprep.subr.bf16.mxu0 0
      %1265 = vmatpush1.bf16.msra.mxu0 0
      %1266 = vmatprep.subr.bf16.mxu0 0
      %1267 = vmatpush1.bf16.msra.mxu0 0
      %1268 = vmatprep.subr.bf16.mxu0 0
      %1269 = vmatpush1.bf16.msra.mxu0 0
      %1270 = vmatprep.subr.bf16.mxu0 0
      %1271 = vmatpush1.bf16.msra.mxu0 0
      %1272 = vmatprep.subr.bf16.mxu0 0
      %1273 = vmatpush1.bf16.msra.mxu0 0
      %1274 = vmatprep.mubr.bf16.mxu0 0
      %1275 = vmatmul.mubr.bf16.gmra.mrb[0].mxu0 %v1161
      %v1276 = vpop.f32.mrb[0].mxu0
      %v1277 = vadd.f32 0.0, %v1276
      %v1278 = vpop.f32.mrb[0].mxu0
      %v1279 = vpop.f32.mrb[0].mxu0
      %v1280 = vadd.f32 0.0, %v1279
      %v1281 = vpop.f32.mrb[0].mxu0
      %1282 = vdwg.mxu0
      %v1299 = vunpack.c.l.b16 %v1162
      %v1300 = vunpack.c.l.b16 %v1163
      %v1301 = vunpack.c.l.b16 %v1164
      %v1302 = vunpack.c.l.b16 %v1165
      %v1303 = vunpack.c.l.b16 %v1166
      %v1304 = vunpack.c.l.b16 %v1167
      %v1305 = vunpack.c.l.b16 %v1168
      %v1306 = vunpack.c.l.b16 %v1169
      %v1307 = vunpack.c.l.b16 %v1170
      %v1308 = vunpack.c.l.b16 %v1171
      %v1309 = vunpack.c.l.b16 %v1172
      %v1310 = vunpack.c.l.b16 %v1173
      %v1311 = vunpack.c.l.b16 %v1174
      %v1312 = vunpack.c.l.b16 %v1175
      %v1313 = vunpack.c.l.b16 %v1176
      %v1314 = vunpack.c.l.b16 %v1177
      %v1315 = vpack.c.b16 %v1300, %v1299
      %v1316 = vpack.c.b16 %v1302, %v1301
      %v1317 = vpack.c.b16 %v1304, %v1303
      %v1318 = vpack.c.b16 %v1306, %v1305
      %v1319 = vpack.c.b16 %v1308, %v1307
      %v1320 = vpack.c.b16 %v1310, %v1309
      %v1321 = vpack.c.b16 %v1312, %v1311
      %v1322 = vpack.c.b16 %v1314, %v1313
      %1331 = vmatprep.subr.bf16.mxu0 0
      %1332 = vmatpush1.bf16.msra.mxu0 %v1315
      %1333 = vmatprep.subr.bf16.mxu0 0
      %1334 = vmatpush1.bf16.msra.mxu0 %v1316
      %1335 = vmatprep.subr.bf16.mxu0 0
      %1336 = vmatpush1.bf16.msra.mxu0 %v1317
      %1337 = vmatprep.subr.bf16.mxu0 0
      %1338 = vmatpush1.bf16.msra.mxu0 %v1318
      %1339 = vmatprep.subr.bf16.mxu0 0
      %1340 = vmatpush1.bf16.msra.mxu0 %v1319
      %1341 = vmatprep.subr.bf16.mxu0 0
      %1342 = vmatpush1.bf16.msra.mxu0 %v1320
      %1343 = vmatprep.subr.bf16.mxu0 0
      %1344 = vmatpush1.bf16.msra.mxu0 %v1321
      %1345 = vmatprep.subr.bf16.mxu0 0
      %1346 = vmatpush1.bf16.msra.mxu0 %v1322
      %1347 = vmatprep.subr.bf16.mxu0 0
      %1348 = vmatpush1.bf16.msra.mxu0 0
      %1349 = vmatprep.subr.bf16.mxu0 0
      %1350 = vmatpush1.bf16.msra.mxu0 0
      %1351 = vmatprep.subr.bf16.mxu0 0
      %1352 = vmatpush1.bf16.msra.mxu0 0
      %1353 = vmatprep.subr.bf16.mxu0 0
      %1354 = vmatpush1.bf16.msra.mxu0 0
      %1355 = vmatprep.subr.bf16.mxu0 0
      %1356 = vmatpush1.bf16.msra.mxu0 0
      %1357 = vmatprep.subr.bf16.mxu0 0
      %1358 = vmatpush1.bf16.msra.mxu0 0
      %1359 = vmatprep.subr.bf16.mxu0 0
      %1360 = vmatpush1.bf16.msra.mxu0 0
      %1361 = vmatprep.subr.bf16.mxu0 0
      %1362 = vmatpush1.bf16.msra.mxu0 0
      %1363 = vmatprep.mubr.bf16.mxu0 0
      %1364 = vmatmul.mubr.bf16.gmra.mrb[0].mxu0 %v1049
      %v1365 = vpop.f32.mrb[0].mxu0
      %v1366 = vadd.f32 %v1277, %v1365
      %v1367 = vpop.f32.mrb[0].mxu0
      %v1368 = vpop.f32.mrb[0].mxu0
      %v1369 = vadd.f32 %v1280, %v1368
      %v1370 = vpop.f32.mrb[0].mxu0
      %1371 = vdwg.mxu0
      %v1372 = vld [vmem:[%s3] sm:$0x1]
      %v1374 = vlaneseq
      %v1375 = vshrl.u32 %v1374, 7
      %v1376 = vsub.s32 0, %v1375
      %v1377 = vrot.slane %v1372, %v1376
      %v1379 = vadd.f32 %v1366, %v1377
      %v1380 = vadd.f32 %v1369, %v1377
      %v1383 = vcombine.high %v1379, %v1379
      %v1385 = vunpack.c.l.s4 1966171168
      %v1386 = vunpack.c.0.s8 %v1385
      %v1387 = vlaneseq
      %v1388 = vshrl.u32 %v1387, 7
      %v1389 = vsub.s32 %v1386, %v1388
      %v1390 = vrot.slane %v1379, %v1389
      %v1392 = vunpack.c.l.s4 1966171168
      %v1393 = vunpack.c.0.s8 %v1392
      %v1394 = vlaneseq
      %v1395 = vshrl.u32 %v1394, 7
      %v1396 = vsub.s32 %v1393, %v1395
      %v1397 = vrot.slane %v1383, %v1396
      %v1398 = vcombine.high %v1390, %v1390
      %v1399 = vcombine.high %v1397, %v1397
      %v1401 = vunpack.c.l.s4 1966171168
      %v1402 = vunpack.c.0.s8 %v1401
      %v1403 = vlaneseq
      %v1404 = vshrl.u32 %v1403, 7
      %v1405 = vsub.s32 %v1402, %v1404
      %v1406 = vrot.slane %v1390, %v1405
      %v1408 = vunpack.c.l.s4 1966171168
      %v1409 = vunpack.c.0.s8 %v1408
      %v1410 = vlaneseq
      %v1411 = vshrl.u32 %v1410, 7
      %v1412 = vsub.s32 %v1409, %v1411
      %v1413 = vrot.slane %v1397, %v1412
      %v1415 = vunpack.c.l.s4 1966171168
      %v1416 = vunpack.c.0.s8 %v1415
      %v1417 = vlaneseq
      %v1418 = vshrl.u32 %v1417, 7
      %v1419 = vsub.s32 %v1416, %v1418
      %v1420 = vrot.slane %v1398, %v1419
      %v1422 = vunpack.c.l.s4 1966171168
      %v1423 = vunpack.c.0.s8 %v1422
      %v1424 = vlaneseq
      %v1425 = vshrl.u32 %v1424, 7
      %v1426 = vsub.s32 %v1423, %v1425
      %v1427 = vrot.slane %v1399, %v1426
      %v1428 = vcombine.high %v1406, %v1406
      %v1429 = vcombine.high %v1413, %v1413
      %v1430 = vcombine.high %v1420, %v1420
      %v1431 = vcombine.high %v1427, %v1427
      %v1433 = vunpack.c.l.s4 1966171168
      %v1434 = vunpack.c.0.s8 %v1433
      %v1435 = vlaneseq
      %v1436 = vshrl.u32 %v1435, 7
      %v1437 = vsub.s32 %v1434, %v1436
      %v1438 = vrot.slane %v1380, %v1437
      %v1439 = vcombine.high %v1438, %v1438
      %v1441 = vunpack.c.l.s4 1966171168
      %v1442 = vunpack.c.0.s8 %v1441
      %v1443 = vlaneseq
      %v1444 = vshrl.u32 %v1443, 7
      %v1445 = vsub.s32 %v1442, %v1444
      %v1446 = vrot.slane %v1438, %v1445
      %v1448 = vunpack.c.l.s4 1966171168
      %v1449 = vunpack.c.0.s8 %v1448
      %v1450 = vlaneseq
      %v1451 = vshrl.u32 %v1450, 7
      %v1452 = vsub.s32 %v1449, %v1451
      %v1453 = vrot.slane %v1439, %v1452
      %v1454 = vcombine.high %v1446, %v1446
      %v1455 = vcombine.high %v1453, %v1453
      %v1456 = vcombine.low %v1406, %v1420
      %v1458 = vunpack.c.l.s4 1966171168
      %v1459 = vunpack.c.0.s8 %v1458
      %v1460 = vlaneseq
      %v1461 = vshrl.u32 %v1460, 7
      %v1462 = vsub.s32 %v1459, %v1461
      %v1463 = vrot.slane %v1456, %v1462
      %v1465 = vunpack.c.l.s4 1966171168
      %v1466 = vunpack.c.0.s8 %v1465
      %v1467 = vlaneseq
      %v1468 = vshrl.u32 %v1467, 7
      %v1469 = vsub.s32 %v1466, %v1468
      %v1470 = vrot.slane %v1428, %v1469
      %v1471 = vcombine.low %v1463, %v1470
      %v1473 = vunpack.c.l.s4 1966171168
      %v1474 = vunpack.c.0.s8 %v1473
      %v1475 = vlaneseq
      %v1476 = vshrl.u32 %v1475, 7
      %v1477 = vsub.s32 %v1474, %v1476
      %v1478 = vrot.slane %v1471, %v1477
      %v1479 = vcombine.low %v1430, %v1413
      %v1481 = vunpack.c.l.s4 1966171168
      %v1482 = vunpack.c.0.s8 %v1481
      %v1483 = vlaneseq
      %v1484 = vshrl.u32 %v1483, 7
      %v1485 = vsub.s32 %v1482, %v1484
      %v1486 = vrot.slane %v1479, %v1485
      %v1488 = vunpack.c.l.s4 1966171168
      %v1489 = vunpack.c.0.s8 %v1488
      %v1490 = vlaneseq
      %v1491 = vshrl.u32 %v1490, 7
      %v1492 = vsub.s32 %v1489, %v1491
      %v1493 = vrot.slane %v1427, %v1492
      %v1494 = vcombine.low %v1486, %v1493
      %v1496 = vunpack.c.l.s4 1966171168
      %v1497 = vunpack.c.0.s8 %v1496
      %v1498 = vlaneseq
      %v1499 = vshrl.u32 %v1498, 7
      %v1500 = vsub.s32 %v1497, %v1499
      %v1501 = vrot.slane %v1494, %v1500
      %v1502 = vcombine.low %v1429, %v1431
      %v1504 = vunpack.c.l.s4 1966171168
      %v1505 = vunpack.c.0.s8 %v1504
      %v1506 = vlaneseq
      %v1507 = vshrl.u32 %v1506, 7
      %v1508 = vsub.s32 %v1505, %v1507
      %v1509 = vrot.slane %v1502, %v1508
      %v1511 = vunpack.c.l.s4 1966171168
      %v1512 = vunpack.c.0.s8 %v1511
      %v1513 = vlaneseq
      %v1514 = vshrl.u32 %v1513, 7
      %v1515 = vsub.s32 %v1512, %v1514
      %v1516 = vrot.slane %v1446, %v1515
      %v1517 = vcombine.low %v1509, %v1516
      %v1519 = vunpack.c.l.s4 1966171168
      %v1520 = vunpack.c.0.s8 %v1519
      %v1521 = vlaneseq
      %v1522 = vshrl.u32 %v1521, 7
      %v1523 = vsub.s32 %v1520, %v1522
      %v1524 = vrot.slane %v1517, %v1523
      %v1525 = vcombine.low %v1453, %v1454
      %v1527 = vunpack.c.l.s4 1966171168
      %v1528 = vunpack.c.0.s8 %v1527
      %v1529 = vlaneseq
      %v1530 = vshrl.u32 %v1529, 7
      %v1531 = vsub.s32 %v1528, %v1530
      %v1532 = vrot.slane %v1525, %v1531
      %v1534 = vunpack.c.l.s4 1966171168
      %v1535 = vunpack.c.0.s8 %v1534
      %v1536 = vlaneseq
      %v1537 = vshrl.u32 %v1536, 7
      %v1538 = vsub.s32 %v1535, %v1537
      %v1539 = vrot.slane %v1455, %v1538
      %v1540 = vcombine.low %v1532, %v1539
      %v1542 = vunpack.c.l.s4 1966171168
      %v1543 = vunpack.c.0.s8 %v1542
      %v1544 = vlaneseq
      %v1545 = vshrl.u32 %v1544, 7
      %v1546 = vsub.s32 %v1543, %v1545
      %v1547 = vrot.slane %v1540, %v1546
      %1552 = vst [vmem:[%s202] sm:$0x7] %v1478
      %1553 = vst [vmem:[%s202 + $0x4] sm:$0x7] %v1501
      %1554 = vst [vmem:[%s202 + $0x8] sm:$0x7] %v1524
      %1555 = vst [vmem:[%s202 + $0xc] sm:$0x7] %v1547
      %s1556 = smul.u32 4, %s15
      %p1557 = scmp.lt.s32.totalorder %s1556, 15
      %s1558 = scalar_select %p1557, %s1556, 15
      %s1559 = smul.addr %s1558, 4
      %s1560 = scalar_lea.vmem %s4, %s1559
      // Predicated region
      $region37: #{patch_merging.1} parent=35 // pred_check
        %p1561 = pneg %p122
      $region38: #{patch_merging.1} parent=35 // pred_check_branch
        %1563 = sbr.rel (%p1561) target = $region40
      $region39: #{patch_merging.1} parent=35 // pred_region
        %s1564 = smul.u32 4, %s15
      $region40: #{patch_merging.1} parent=35 // pred_fallthru
        _
    $region36: #{patch_merging.1} parent=5 // pred_fallthru
      _
    %p1565 = scmp.le.s32.totalorder 2, %s10
    // Predicated region
    $region41: #{patch_merging.1} parent=5 // pred_check
      %p1566 = pneg %p1565
    $region42: #{patch_merging.1} parent=5 // pred_check_branch
      %1568 = sbr.rel (%p1566) target = $region44
    $region43: #{patch_merging.1} parent=5 // pred_region
      %s1569 = ssub.s32 %s10, 2
      // Predicated region
      $region45: #{patch_merging.1} parent=43 // pred_check
        %p1570 = pneg %p128
      $region46: #{patch_merging.1} parent=43 // pred_check_branch
        %1572 = sbr.rel (%p1570) target = $region48
      $region47: #{patch_merging.1} parent=43 // pred_region
        %s1573 = smul.u32 4, %s16
        %p1574 = scmp.lt.s32.totalorder %s1573, 15
        %s1575 = scalar_select %p1574, %s1573, 15
        %s1576 = smul.addr %s1575, 4
        %s1577 = scalar_lea.vmem %s4, %s1576
      $region48: #{patch_merging.1} parent=43 // pred_fallthru
        _
    $region44: #{patch_merging.1} parent=5 // pred_fallthru
      _
  $region6: #{patch_merging.1} parent=0 // loop_footer
    %s14 = sadd.s32 1, %s10
  $region7: #{patch_merging.1} parent=0 // loop_footer_branch
    %9 = sbr.rel target = $region3
  $region8: #{patch_merging.1} parent=0 // loop_exit
    _

</llo_original>
